<compile_context>
chip_gen: v5e
topology: v5e:2x2
jax: 0.10.0
libtpu: 0.0.40
codegen_flags: <defaults>
</compile_context>

<pallas_src>
import functools

import jax
import jax.numpy as jnp
from jax.experimental import pallas as pl
from jax.experimental.pallas import tpu as pltpu


@functools.lru_cache(maxsize=1)
def _vmem_limit_bytes():
    """Generation-aware VMEM limit: ~75% of physical (96 MiB v5e/v6e, 48 MiB v7x)."""
    try:
        physical = int(pltpu.get_tpu_info().vmem_capacity_bytes)
    except Exception:
        physical = 64 * 1024 * 1024  # conservative (v7x per-core VMEM)
    return (physical * 3) // 4


def _choose_voxel_tile(M, Cin, Cout8, in_bytes, out_bytes, vmem_budget):
    """Voxel (lane) tile: as large as the VMEM budget allows, preferring exact divisors."""
    if M <= 1024:
        return M  # full voxel axis in one block (always a legal block shape)
    # The constant-index weight block is DMA'd once but still reserves 2 buffers.
    w_bytes = 2 * Cout8 * Cin * in_bytes
    per_col = 2 * (Cin * in_bytes + Cout8 * out_bytes)  # double-buffered x + out tiles
    avail = vmem_budget - w_bytes
    max_cols = 128 if avail < 128 * per_col else avail // per_col
    # TODO(synk): if the resident weight alone exceeds the budget (huge Cin*Cout),
    # an extra grid axis over the 8*Cout rows would be needed.
    cap = int(min(4096, max_cols, M))
    cap = max(128, (cap // 128) * 128)
    # Prefer the largest multiple of 128 that divides M exactly (dense unmasked vst,
    # no wasted ragged grid step); D*H*W is usually a power of two so this hits.
    t = cap
    while t >= 128:
        if M % t == 0:
            return t
        t -= 128
    return cap


def _deconv_matmul_kernel(x_ref, w_ref, o_ref, *, compute_dtype):
    x = x_ref[...]
    if compute_dtype is not None:
        # In-kernel cast: VPU has slack under the DMA bound, and this avoids a
        # separate wrapper-side XLA convert pass over X in HBM.
        x = x.astype(compute_dtype)
    acc = jnp.dot(w_ref[...], x, preferred_element_type=jnp.float32)
    o_ref[...] = acc.astype(o_ref.dtype)


def _deconv_matmul(x3, w2t, out_dtype, compute_dtype, force_pallas):
    """x3: (N, Cin, M), w2t: (8*Cout, Cin) -> Yt (N, 8*Cout, M) in out_dtype (no bias)."""
    N, Cin, M = x3.shape
    Cout8 = w2t.shape[0]
    out_itemsize = jnp.dtype(out_dtype).itemsize

    # Tiny problems: Pallas launch/grid-step overhead dominates; let XLA fuse it.
    if not force_pallas and N * Cout8 * M * out_itemsize < (2 << 20):
        xc = x3 if compute_dtype is None else x3.astype(compute_dtype)
        y = jnp.einsum("oc,ncm->nom", w2t, xc, preferred_element_type=jnp.float32)
        return y.astype(out_dtype)

    vmem_limit = _vmem_limit_bytes()
    tile_budget = vmem_limit - (4 << 20)  # headroom for compiler-internal scratch
    tn = _choose_voxel_tile(M, Cin, Cout8, x3.dtype.itemsize, out_itemsize, tile_budget)
    grid = (N, pl.cdiv(M, tn))

    flops = 2 * N * M * Cin * Cout8
    bytes_accessed = (N * Cin * M * x3.dtype.itemsize
                      + Cout8 * Cin * w2t.dtype.itemsize
                      + N * Cout8 * M * out_itemsize)

    kernel = functools.partial(_deconv_matmul_kernel, compute_dtype=compute_dtype)
    return pl.pallas_call(
        kernel,
        out_shape=jax.ShapeDtypeStruct((N, Cout8, M), out_dtype),
        grid_spec=pltpu.PrefetchScalarGridSpec(
            num_scalar_prefetch=0,
            grid=grid,
            in_specs=[
                # x: batch-squeezed (Cin, tn) block, voxels on lanes.
                pl.BlockSpec((None, Cin, tn), lambda n, j: (n, 0, j)),
                # weight: constant-indexed -> DMA'd once, stays resident in VMEM.
                pl.BlockSpec((Cout8, Cin), lambda n, j: (0, 0)),
            ],
            out_specs=pl.BlockSpec((None, Cout8, tn), lambda n, j: (n, 0, j)),
        ),
        compiler_params=pltpu.CompilerParams(
            dimension_semantics=("parallel", "parallel"),
            vmem_limit_bytes=vmem_limit,
        ),
        cost_estimate=pl.CostEstimate(
            flops=flops, transcendentals=0, bytes_accessed=bytes_accessed),
    )(x3, w2t)


def conv_transpose3d_k2s2(x, weight, bias=None, *, compute_dtype=None,
                          force_pallas=False):
    """ConvTranspose3d(kernel_size=2, stride=2) matching PyTorch.

    x:      (N, Cin, D, H, W)
    weight: (Cin, Cout, 2, 2, 2)   (PyTorch ConvTranspose3d weight layout)
    bias:   (Cout,) or None
    compute_dtype: optional dtype (e.g. jnp.bfloat16) for the matmul inputs and the
                   intermediate Yt; MXU accumulation and bias add remain float32.
    returns (N, Cout, 2D, 2H, 2W) in x.dtype
    """
    N, Cin, D, H, W = x.shape
    Cout = weight.shape[1]
    out_dtype = x.dtype

    # W2t[(kd,kh,kw,cout), cin] = weight[cin, cout, kd, kh, kw]   (tiny; cast here)
    w2t = jnp.transpose(weight, (2, 3, 4, 1, 0)).reshape(8 * Cout, Cin)
    if compute_dtype is not None:
        w2t = w2t.astype(compute_dtype)

    # NCDHW is already (Cin, D*H*W)-contiguous per batch: free reshape, no transpose,
    # and (per perf feedback) NO wrapper-side dtype cast of the activations.
    x3 = x.reshape(N, Cin, D * H * W)

    # Intermediate Yt dtype: bf16 when computing in bf16 (halves the dominant Yt
    # store + re-read HBM traffic); otherwise keep the activation dtype.
    yt_dtype = compute_dtype if compute_dtype is not None else out_dtype

    y = _deconv_matmul(x3, w2t, yt_dtype, compute_dtype, force_pallas)  # (N, 8*Cout, M)

    # Tap-scatter into the interleaved (2D, 2H, 2W) grid + f32 bias add; XLA fuses
    # this with the downstream concat copy into a single HBM pass.
    y = y.reshape(N, 2, 2, 2, Cout, D, H, W)
    y = jnp.transpose(y, (0, 4, 5, 1, 6, 2, 7, 3))  # (N, Cout, D, kd, H, kh, W, kw)
    y = y.reshape(N, Cout, 2 * D, 2 * H, 2 * W)
    if bias is not None:
        y = y.astype(jnp.float32) + bias.astype(jnp.float32)[None, :, None, None, None]
    return y.astype(out_dtype)


@functools.partial(jax.jit, static_argnames=("compute_dtype", "force_pallas"))
def unet_upsampling_block3d_forward(weight, bias, *args, compute_dtype=None,
                                    force_pallas=False):
    """Mirrors UNetUpSamplingBlock3D.forward (deconv=True)."""
    if len(args) == 2:
        inputs1, inputs2 = args
        up = conv_transpose3d_k2s2(inputs2, weight, bias,
                                   compute_dtype=compute_dtype,
                                   force_pallas=force_pallas)
        # Channel concat is left to XLA so it fuses with the tap-scatter + bias add.
        return jnp.concatenate([inputs1, up], axis=1)
    return conv_transpose3d_k2s2(args[0], weight, bias,
                                 compute_dtype=compute_dtype,
                                 force_pallas=force_pallas)


if __name__ == "__main__":
    key = jax.random.PRNGKey(0)
    k1, k2, k3, k4 = jax.random.split(key, 4)

    N = 2
    in_channels = 8
    out_channels = 4
    D = H = W = 8

    # Deterministic parameter init (same shapes/bounds as PyTorch default init).
    fan_in = in_channels * 2 * 2 * 2
    bound = 1.0 / jnp.sqrt(fan_in)
    weight = jax.random.uniform(
        k1, (in_channels, out_channels, 2, 2, 2),
        minval=-bound, maxval=bound, dtype=jnp.float32)
    bias = jax.random.uniform(
        k2, (out_channels,), minval=-bound, maxval=bound, dtype=jnp.float32)

    # inputs2 is the low-resolution feature map to upsample; inputs1 is the
    # skip connection at the upsampled resolution.
    inputs2 = jax.random.normal(k3, (N, in_channels, D, H, W), dtype=jnp.float32)
    inputs1 = jax.random.normal(
        k4, (N, out_channels, 2 * D, 2 * H, 2 * W), dtype=jnp.float32)

    # Pure-JAX f32 reference for ConvTranspose3d(k=2, s=2).
    up_ref = jnp.einsum("ncdhw,copqr->nodphqwr", inputs2, weight,
                        precision=jax.lax.Precision.HIGHEST)
    up_ref = up_ref.reshape(N, out_channels, 2 * D, 2 * H, 2 * W)
    up_ref = up_ref + bias[None, :, None, None, None]
    ref = jnp.concatenate([inputs1, up_ref], axis=1)

    # forward_concat, forced through the Pallas kernel (shapes here are below the
    # auto-dispatch threshold where the XLA fallback would otherwise be used).
    out = jax.block_until_ready(
        unet_upsampling_block3d_forward(weight, bias, inputs1, inputs2,
                                        force_pallas=True))
    assert out.shape == (N, 2 * out_channels, 2 * D, 2 * H, 2 * W), out.shape
    assert jnp.allclose(out, ref, atol=1e-5, rtol=1e-5)

    # forward_standard path (Pallas).
    out_std = jax.block_until_ready(
        unet_upsampling_block3d_forward(weight, bias, inputs2, force_pallas=True))
    assert out_std.shape == (N, out_channels, 2 * D, 2 * H, 2 * W)
    assert jnp.allclose(out_std, up_ref, atol=1e-5, rtol=1e-5)

    # bf16 compute path (v5e/v6e/v7x bandwidth recommendation): bf16 matmul inputs
    # and bf16 intermediate Yt, f32 accumulation + bias — looser tolerance vs f32.
    out_bf16 = jax.block_until_ready(
        unet_upsampling_block3d_forward(weight, bias, inputs1, inputs2,
                                        compute_dtype=jnp.bfloat16,
                                        force_pallas=True))
    assert out_bf16.shape == ref.shape
    assert jnp.allclose(out_bf16, ref, atol=5e-2, rtol=5e-2)

    # Auto-dispatch path (tiny problem -> fused XLA fallback) must match too.
    out_auto = jax.block_until_ready(
        unet_upsampling_block3d_forward(weight, bias, inputs1, inputs2))
    assert jnp.allclose(out_auto, ref, atol=1e-5, rtol=1e-5)

    print("KERNEL_OK")
</pallas_src>

<mosaic_0001>
module attributes {stable_mosaic.version = 11 : i64} {
  func.func @_deconv_matmul_kernel(%arg0: i32, %arg1: i32, %arg2: memref<1x8x512xf32, #tpu.memory_space<vmem>>, %arg3: memref<32x8xf32, #tpu.memory_space<vmem>>, %arg4: memref<1x32x512xf32, #tpu.memory_space<vmem>>) attributes {dimension_semantics = [#tpu.dimension_semantics<parallel>, #tpu.dimension_semantics<parallel>], iteration_bounds = array<i64: 2, 1>, scalar_prefetch = 0 : i64, scratch_operands = 0 : i64, tpu.core_type = #tpu.core_type<tc>, window_params = [{transform_indices = @transform_0, window_bounds = array<i64: 1, 8, 512>}, {pipeline_mode = #tpu.pipeline_mode<synchronous>, transform_indices = @transform_1, window_bounds = array<i64: 32, 8>}, {transform_indices = @transform_2, window_bounds = array<i64: 1, 32, 512>}]} {
    %c0 = arith.constant 0 : index
    %c0_0 = arith.constant 0 : index
    %c0_1 = arith.constant 0 : index
    %0 = vector.load %arg2[%c0, %c0_0, %c0_1] : memref<1x8x512xf32, #tpu.memory_space<vmem>>, vector<1x8x512xf32>
    %1 = vector.shape_cast %0 : vector<1x8x512xf32> to vector<8x512xf32>
    %c0_2 = arith.constant 0 : index
    %c0_3 = arith.constant 0 : index
    %2 = vector.load %arg3[%c0_2, %c0_3] : memref<32x8xf32, #tpu.memory_space<vmem>>, vector<32x8xf32>
    %cst = arith.constant dense<0.000000e+00> : vector<32x512xf32>
    %3 = tpu.matmul %2, %1, %cst {dimension_numbers = #tpu.dot_dimension_numbers<[1], [0], [0], [1], [0, 0, 1, 1], [], []>} : vector<32x8xf32>, vector<8x512xf32>, vector<32x512xf32> -> vector<32x512xf32>
    %c0_4 = arith.constant 0 : index
    %c0_5 = arith.constant 0 : index
    %c0_6 = arith.constant 0 : index
    %4 = vector.load %arg4[%c0_4, %c0_5, %c0_6] : memref<1x32x512xf32, #tpu.memory_space<vmem>>, vector<1x32x512xf32>
    %5 = vector.shape_cast %4 : vector<1x32x512xf32> to vector<32x512xf32>
    %6 = vector.shape_cast %3 : vector<32x512xf32> to vector<1x32x512xf32>
    tpu.vector_store %arg4[%c0_4, %c0_5, %c0_6], %6 {strides = array<i32>} : memref<1x32x512xf32, #tpu.memory_space<vmem>>, vector<1x32x512xf32>,
    return
  }
  func.func @transform_0(%arg0: i32, %arg1: i32) -> (i32, i32, i32) {
    %c0_i32 = arith.constant 0 : i32
    %c0_i32_0 = arith.constant 0 : i32
    return %arg0, %c0_i32, %arg1 : i32, i32, i32
  }
  func.func @transform_1(%arg0: i32, %arg1: i32) -> (i32, i32) {
    %c0_i32 = arith.constant 0 : i32
    %c0_i32_0 = arith.constant 0 : i32
    %c0_i32_1 = arith.constant 0 : i32
    return %c0_i32, %c0_i32_0 : i32, i32
  }
  func.func @transform_2(%arg0: i32, %arg1: i32) -> (i32, i32, i32) {
    %c0_i32 = arith.constant 0 : i32
    %c0_i32_0 = arith.constant 0 : i32
    return %arg0, %c0_i32, %arg1 : i32, i32, i32
  }
}

</mosaic_0001>

<llo_original>
// kernel: unet_upsampling_block3d_forward.1
$region0: #{unet_upsampling_block3d_forward.1}
  #allocation0 [shape = 'u32[]', space=smem, size = 0x4, offset = 0x4, fixed_abs, tag = 'smem constant byte address 0x4 - core index']
  #allocation1 [shape = 'u32[72,128]{1,0:T(1,128)}', space=vmem, size = 0x9000, scoped, tag = 'internal scratch']
  %s0 = inlined_call_operand.vmem [shape: f32[2,8,512], index: 0, kind: input, shape index: {}]
  %s1 = inlined_call_operand.vmem [shape: f32[32,8], index: 1, kind: input, shape index: {}]
  %s2 = inlined_call_operand.vmem [shape: f32[2,32,512], index: 2, kind: output, shape index: {}]
  %s3 = sld [smem:[#allocation0]]
  $region41: #{unet_upsampling_block3d_forward.1} parent=0
    _
  %s5 = ssub.s32 1, %s3
  %s6 = scalar_select 0, %s5, %s3
  loop: start=0, step=1, limit=4
  $region2: #{unet_upsampling_block3d_forward.1} parent=0 // loop_pre_header
    _
  $region3: #{unet_upsampling_block3d_forward.1} parent=0 // loop_header
    %s8 = sphi 0, %s12
    %p9 = scmp.ge.s32.totalorder %s8, 4
    %s15 = sphi 0, %s27
    %s16 = sphi 0, %s23
    %s17 = sphi 0, %s15
    %s18 = sphi 0, %s16
    %s19 = sphi 0, %s17
    %s20 = sphi 0, %s18
    %s32 = sphi 0, %s34
    %s35 = sphi 0, %s32
    %s36 = sphi 0, %s35
    %s52 = sphi 0, %s36
    %s56 = sphi 0, %s56
    %s58 = sphi 0, %s56
    %s59 = sphi 0, %s58
    %s73 = sphi 0, %s59
    %s81 = sphi 0, %s83
    %s84 = sphi 0, %s81
    %s85 = sphi 0, %s84
    %s101 = sphi 0, %s85
  $region4: #{unet_upsampling_block3d_forward.1} parent=0 // loop_header_branch
    %11 = sbr.rel (%p9) target = $region8
  $region5: #{unet_upsampling_block3d_forward.1} parent=0 // loop_body
    %s13 = ssub.s32 %s8, 1
    %s14 = ssub.s32 %s8, 2
    %s21 = sadd.s32 1, %s16
    %p22 = scmp.ge.s32.totalorder %s21, 1
    %s23 = scalar_select %p22, 0, %s21
    %s24 = sadd.s32 1, %s15
    %s25 = scalar_select %p22, %s24, %s15
    %p26 = scmp.ge.s32.totalorder %s25, 2
    %s27 = scalar_select %p26, 0, %s25
    %s28 = ssub.s32 %s15, %s27
    %s29 = ssub.s32 %s16, %s23
    %s30 = sor.u32 %s28, %s29
    %p31 = scmp.eq.s32.totalorder %s30, 0
    %s33 = sadd.s32 %s32, 1
    %s34 = scalar_select %p31, %s32, %s33
    %p37 = pneg %p31
    %p38 = scmp.eq.s32.totalorder %s8, 1
    %p39 = por %p37, %p38
    %p40 = scmp.ne.s32.totalorder %s32, %s35
    %p41 = scmp.eq.s32.totalorder %s8, 0
    %p42 = por %p40, %p41
    %p43 = scmp.ne.s32.totalorder %s32, %s35
    %p44 = scmp.eq.s32.totalorder %s13, 1
    %p45 = por %p43, %p44
    %p46 = scmp.ne.s32.totalorder %s35, %s36
    %p47 = scmp.eq.s32.totalorder %s13, 0
    %p48 = por %p46, %p47
    %p49 = scmp.ne.s32.totalorder %s35, %s36
    %p50 = scmp.eq.s32.totalorder %s14, 1
    %p51 = por %p49, %p50
    %p53 = scmp.ne.s32.totalorder %s36, %s52
    %p54 = scmp.eq.s32.totalorder %s14, 0
    %p55 = por %p53, %p54
    %s57 = sadd.s32 %s56, 1
    %p60 = scmp.eq.s32.totalorder %s8, 1
    %p61 = scmp.ne.s32.totalorder %s56, %s58
    %p62 = scmp.eq.s32.totalorder %s8, 0
    %p63 = por %p61, %p62
    %p64 = scmp.ne.s32.totalorder %s56, %s58
    %p65 = scmp.eq.s32.totalorder %s13, 1
    %p66 = por %p64, %p65
    %p67 = scmp.ne.s32.totalorder %s58, %s59
    %p68 = scmp.eq.s32.totalorder %s13, 0
    %p69 = por %p67, %p68
    %p70 = scmp.ne.s32.totalorder %s58, %s59
    %p71 = scmp.eq.s32.totalorder %s14, 1
    %p72 = por %p70, %p71
    %p74 = scmp.ne.s32.totalorder %s59, %s73
    %p75 = scmp.eq.s32.totalorder %s14, 0
    %p76 = por %p74, %p75
    %s77 = ssub.s32 %s15, %s27
    %s78 = ssub.s32 %s16, %s23
    %s79 = sor.u32 %s77, %s78
    %p80 = scmp.eq.s32.totalorder %s79, 0
    %s82 = sadd.s32 %s81, 1
    %s83 = scalar_select %p80, %s81, %s82
    %p86 = pneg %p80
    %p87 = scmp.eq.s32.totalorder %s8, 1
    %p88 = por %p86, %p87
    %p89 = scmp.ne.s32.totalorder %s81, %s84
    %p90 = scmp.eq.s32.totalorder %s8, 0
    %p91 = por %p89, %p90
    %p92 = scmp.ne.s32.totalorder %s81, %s84
    %p93 = scmp.eq.s32.totalorder %s13, 1
    %p94 = por %p92, %p93
    %p95 = scmp.ne.s32.totalorder %s84, %s85
    %p96 = scmp.eq.s32.totalorder %s13, 0
    %p97 = por %p95, %p96
    %p98 = scmp.ne.s32.totalorder %s84, %s85
    %p99 = scmp.eq.s32.totalorder %s14, 1
    %p100 = por %p98, %p99
    %p102 = scmp.ne.s32.totalorder %s85, %s101
    %p103 = scmp.eq.s32.totalorder %s14, 0
    %p104 = por %p102, %p103
    %p105 = scmp.le.s32.totalorder 1, %s8
    %p106 = scmp.lt.s32.totalorder %s8, 3
    %p107 = pnand %p105, %p106
    %p108 = pneg %p107
    // Predicated region
    $region9: #{unet_upsampling_block3d_forward.1} parent=5 // pred_check
      _
    $region10: #{unet_upsampling_block3d_forward.1} parent=5 // pred_check_branch
      %110 = sbr.rel (%p107) target = $region12
    $region11: #{unet_upsampling_block3d_forward.1} parent=5 // pred_region
      %s111 = ssub.s32 %s8, 1
      // Predicated region
      $region13: #{unet_upsampling_block3d_forward.1} parent=11 // pred_check
        %p112 = pneg %p69
      $region14: #{unet_upsampling_block3d_forward.1} parent=11 // pred_check_branch
        %114 = sbr.rel (%p112) target = $region16
      $region15: #{unet_upsampling_block3d_forward.1} parent=11 // pred_region
        _
      $region16: #{unet_upsampling_block3d_forward.1} parent=11 // pred_fallthru
        _
    $region12: #{unet_upsampling_block3d_forward.1} parent=5 // pred_fallthru
      _
    %p115 = scmp.lt.s32.totalorder %s8, 2
    // Predicated region
    $region17: #{unet_upsampling_block3d_forward.1} parent=5 // pred_check
      %p116 = pneg %p115
    $region18: #{unet_upsampling_block3d_forward.1} parent=5 // pred_check_branch
      %118 = sbr.rel (%p116) target = $region20
    $region19: #{unet_upsampling_block3d_forward.1} parent=5 // pred_region
      // Predicated region
      $region21: #{unet_upsampling_block3d_forward.1} parent=19 // pred_check
        %p119 = pneg %p42
      $region22: #{unet_upsampling_block3d_forward.1} parent=19 // pred_check_branch
        %121 = sbr.rel (%p119) target = $region24
      $region23: #{unet_upsampling_block3d_forward.1} parent=19 // pred_region
        %s122 = smul.u32 4, %s16
        %p123 = scmp.lt.s32.totalorder %s15, 1
        %s124 = scalar_select %p123, %s15, 1
        %p125 = scmp.lt.s32.totalorder %s122, 3
        %s126 = scalar_select %p125, %s122, 3
        %s127 = smul.addr %s124, 4
        %s128 = sadd.s32 %s126, %s127
        %s129 = smul.addr %s128, 8
        %s130 = scalar_lea.vmem %s0, %s129
        %s131 = smul.u32 4, %s16
      $region24: #{unet_upsampling_block3d_forward.1} parent=19 // pred_fallthru
        _
    $region20: #{unet_upsampling_block3d_forward.1} parent=5 // pred_fallthru
      _
    %p132 = scmp.le.s32.totalorder 1, %s8
    %p133 = scmp.lt.s32.totalorder %s8, 3
    %p134 = pnand %p132, %p133
    %p135 = pneg %p134
    // Predicated region
    $region25: #{unet_upsampling_block3d_forward.1} parent=5 // pred_check
      _
    $region26: #{unet_upsampling_block3d_forward.1} parent=5 // pred_check_branch
      %137 = sbr.rel (%p134) target = $region28
    $region27: #{unet_upsampling_block3d_forward.1} parent=5 // pred_region
      %s138 = ssub.s32 %s8, 1
      %s139 = smul.u32 4, %s18
      %p140 = scmp.lt.s32.totalorder %s17, 1
      %s141 = scalar_select %p140, %s17, 1
      %p142 = scmp.lt.s32.totalorder %s139, 3
      %s143 = scalar_select %p142, %s139, 3
      %s144 = smul.addr %s141, 4
      %s145 = sadd.s32 %s143, %s144
      %s146 = smul.addr %s145, 8
      %s147 = scalar_lea.vmem %s0, %s146
      %p148 = pneg %p48
      %p149 = pneg %p45
      %p150 = pneg %p69
      %p151 = pneg %p66
      %p152 = pneg %p97
      %p153 = pneg %p94
      %s154 = smul.u32 4, %s18
      %p155 = scmp.lt.s32.totalorder %s17, 1
      %s156 = scalar_select %p155, %s17, 1
      %p157 = scmp.lt.s32.totalorder %s154, 3
      %s158 = scalar_select %p157, %s154, 3
      %s159 = smul.addr %s156, 16
      %s160 = sadd.s32 %s158, %s159
      %s161 = smul.addr %s160, 8
      %s162 = scalar_lea.vmem %s2, %s161
      %s163 = smul.u32 4, %s18
      %p164 = scmp.lt.s32.totalorder %s17, 1
      %s165 = scalar_select %p164, %s17, 1
      %p166 = scmp.lt.s32.totalorder %s163, 3
      %s167 = scalar_select %p166, %s163, 3
      %s168 = smul.addr %s165, 4
      %s169 = sadd.s32 %s167, %s168
      %s170 = smul.addr %s169, 8
      %s171 = scalar_lea.vmem %s0, %s170
      %s172 = smul.u32 4, %s18
      %s173 = smul.u32 4, %s18
      %p174 = scmp.lt.s32.totalorder %s17, 1
      %s175 = scalar_select %p174, %s17, 1
      %p176 = scmp.lt.s32.totalorder %s173, 3
      %s177 = scalar_select %p176, %s173, 3
      %s178 = smul.addr %s175, 16
      %s179 = sadd.s32 %s177, %s178
      %s180 = smul.addr %s179, 8
      %s181 = scalar_lea.vmem %s2, %s180
      %s182 = smul.u32 4, %s18
      %v183 = vld [vmem:[%s171] sm:$0xff]
      %v184 = vld [vmem:[%s171 + $0x8] sm:$0xff]
      %v185 = vld [vmem:[%s171 + $0x10] sm:$0xff]
      %v186 = vld [vmem:[%s171 + $0x18] sm:$0xff]
      %v187 = vld [vmem:[%s1] sm:$0xff]
      %v188 = vld [vmem:[%s1 + $0x8] sm:$0xff]
      %v189 = vld [vmem:[%s1 + $0x10] sm:$0xff]
      %v190 = vld [vmem:[%s1 + $0x18] sm:$0xff]
      %vm191 = vcmask 64512
      %v193 = vsel %vm191, %v187, 0
      %v196 = vsel %vm191, %v188, 0
      %v199 = vsel %vm191, %v189, 0
      %v202 = vsel %vm191, %v190, 0
      %204 = vmatpush.msra.mxu0 0.0
      %205 = vmatpush.msra.mxu0 0.0
      %206 = vmatpush.msra.mxu0 0.0
      %207 = vmatpush.msra.mxu0 0.0
      %208 = vmatpush.msra.mxu0 0.0
      %209 = vmatpush.msra.mxu0 0.0
      %210 = vmatpush.msra.mxu0 0.0
      %211 = vmatpush.msra.mxu0 0.0
      %212 = vmatpush.msra.mxu0 0.0
      %213 = vmatpush.msra.mxu0 0.0
      %214 = vmatpush.msra.mxu0 0.0
      %215 = vmatpush.msra.mxu0 0.0
      %216 = vmatpush.msra.mxu0 0.0
      %217 = vmatpush.msra.mxu0 0.0
      %218 = vmatpush.msra.mxu0 0.0
      %219 = vmatpush.msra.mxu0 %v183
      %220 = vmatmul.f32.gmra.mxu0 %v193
      %v221 = vpop.f32.mrf.mxu0
      %v222 = vadd.f32 0.0, %v221
      %223 = vmatmul.f32.gmra.mxu0 %v196
      %v224 = vpop.f32.mrf.mxu0
      %v225 = vadd.f32 0.0, %v224
      %226 = vmatmul.f32.gmra.mxu0 %v199
      %v227 = vpop.f32.mrf.mxu0
      %v228 = vadd.f32 0.0, %v227
      %229 = vmatmul.f32.gmra.mxu0 %v202
      %v230 = vpop.f32.mrf.mxu0
      %v231 = vadd.f32 0.0, %v230
      %232 = vdwg.mxu0
      %233 = vmatpush.msra.mxu0 0.0
      %234 = vmatpush.msra.mxu0 0.0
      %235 = vmatpush.msra.mxu0 0.0
      %236 = vmatpush.msra.mxu0 0.0
      %237 = vmatpush.msra.mxu0 0.0
      %238 = vmatpush.msra.mxu0 0.0
      %239 = vmatpush.msra.mxu0 0.0
      %240 = vmatpush.msra.mxu0 0.0
      %241 = vmatpush.msra.mxu0 0.0
      %242 = vmatpush.msra.mxu0 0.0
      %243 = vmatpush.msra.mxu0 0.0
      %244 = vmatpush.msra.mxu0 0.0
      %245 = vmatpush.msra.mxu0 0.0
      %246 = vmatpush.msra.mxu0 0.0
      %247 = vmatpush.msra.mxu0 0.0
      %248 = vmatpush.msra.mxu0 %v184
      %249 = vmatmul.f32.gmra.mxu0 %v193
      %v250 = vpop.f32.mrf.mxu0
      %v251 = vadd.f32 0.0, %v250
      %252 = vmatmul.f32.gmra.mxu0 %v196
      %v253 = vpop.f32.mrf.mxu0
      %v254 = vadd.f32 0.0, %v253
      %255 = vmatmul.f32.gmra.mxu0 %v199
      %v256 = vpop.f32.mrf.mxu0
      %v257 = vadd.f32 0.0, %v256
      %258 = vmatmul.f32.gmra.mxu0 %v202
      %v259 = vpop.f32.mrf.mxu0
      %v260 = vadd.f32 0.0, %v259
      %261 = vdwg.mxu0
      %262 = vmatpush.msra.mxu0 0.0
      %263 = vmatpush.msra.mxu0 0.0
      %264 = vmatpush.msra.mxu0 0.0
      %265 = vmatpush.msra.mxu0 0.0
      %266 = vmatpush.msra.mxu0 0.0
      %267 = vmatpush.msra.mxu0 0.0
      %268 = vmatpush.msra.mxu0 0.0
      %269 = vmatpush.msra.mxu0 0.0
      %270 = vmatpush.msra.mxu0 0.0
      %271 = vmatpush.msra.mxu0 0.0
      %272 = vmatpush.msra.mxu0 0.0
      %273 = vmatpush.msra.mxu0 0.0
      %274 = vmatpush.msra.mxu0 0.0
      %275 = vmatpush.msra.mxu0 0.0
      %276 = vmatpush.msra.mxu0 0.0
      %277 = vmatpush.msra.mxu0 %v185
      %278 = vmatmul.f32.gmra.mxu0 %v193
      %v279 = vpop.f32.mrf.mxu0
      %v280 = vadd.f32 0.0, %v279
      %281 = vmatmul.f32.gmra.mxu0 %v196
      %v282 = vpop.f32.mrf.mxu0
      %v283 = vadd.f32 0.0, %v282
      %284 = vmatmul.f32.gmra.mxu0 %v199
      %v285 = vpop.f32.mrf.mxu0
      %v286 = vadd.f32 0.0, %v285
      %287 = vmatmul.f32.gmra.mxu0 %v202
      %v288 = vpop.f32.mrf.mxu0
      %v289 = vadd.f32 0.0, %v288
      %290 = vdwg.mxu0
      %291 = vmatpush.msra.mxu0 0.0
      %292 = vmatpush.msra.mxu0 0.0
      %293 = vmatpush.msra.mxu0 0.0
      %294 = vmatpush.msra.mxu0 0.0
      %295 = vmatpush.msra.mxu0 0.0
      %296 = vmatpush.msra.mxu0 0.0
      %297 = vmatpush.msra.mxu0 0.0
      %298 = vmatpush.msra.mxu0 0.0
      %299 = vmatpush.msra.mxu0 0.0
      %300 = vmatpush.msra.mxu0 0.0
      %301 = vmatpush.msra.mxu0 0.0
      %302 = vmatpush.msra.mxu0 0.0
      %303 = vmatpush.msra.mxu0 0.0
      %304 = vmatpush.msra.mxu0 0.0
      %305 = vmatpush.msra.mxu0 0.0
      %306 = vmatpush.msra.mxu0 %v186
      %307 = vmatmul.f32.gmra.mxu0 %v193
      %v308 = vpop.f32.mrf.mxu0
      %v309 = vadd.f32 0.0, %v308
      %310 = vmatmul.f32.gmra.mxu0 %v196
      %v311 = vpop.f32.mrf.mxu0
      %v312 = vadd.f32 0.0, %v311
      %313 = vmatmul.f32.gmra.mxu0 %v199
      %v314 = vpop.f32.mrf.mxu0
      %v315 = vadd.f32 0.0, %v314
      %316 = vmatmul.f32.gmra.mxu0 %v202
      %v317 = vpop.f32.mrf.mxu0
      %v318 = vadd.f32 0.0, %v317
      %319 = vdwg.mxu0
      %320 = vst [vmem:[%s181] sm:$0xff] %v222
      %321 = vst [vmem:[%s181 + $0x8] sm:$0xff] %v251
      %322 = vst [vmem:[%s181 + $0x10] sm:$0xff] %v280
      %323 = vst [vmem:[%s181 + $0x18] sm:$0xff] %v309
      %324 = vst [vmem:[%s181 + $0x20] sm:$0xff] %v225
      %325 = vst [vmem:[%s181 + $0x28] sm:$0xff] %v254
      %326 = vst [vmem:[%s181 + $0x30] sm:$0xff] %v283
      %327 = vst [vmem:[%s181 + $0x38] sm:$0xff] %v312
      %328 = vst [vmem:[%s181 + $0x40] sm:$0xff] %v228
      %329 = vst [vmem:[%s181 + $0x48] sm:$0xff] %v257
      %330 = vst [vmem:[%s181 + $0x50] sm:$0xff] %v286
      %331 = vst [vmem:[%s181 + $0x58] sm:$0xff] %v315
      %332 = vst [vmem:[%s181 + $0x60] sm:$0xff] %v231
      %333 = vst [vmem:[%s181 + $0x68] sm:$0xff] %v260
      %334 = vst [vmem:[%s181 + $0x70] sm:$0xff] %v289
      %335 = vst [vmem:[%s181 + $0x78] sm:$0xff] %v318
      %s336 = smul.u32 4, %s18
      %p337 = scmp.lt.s32.totalorder %s17, 1
      %s338 = scalar_select %p337, %s17, 1
      %p339 = scmp.lt.s32.totalorder %s336, 3
      %s340 = scalar_select %p339, %s336, 3
      %s341 = smul.addr %s338, 16
      %s342 = sadd.s32 %s340, %s341
      %s343 = smul.addr %s342, 8
      %s344 = scalar_lea.vmem %s2, %s343
      // Predicated region
      $region29: #{unet_upsampling_block3d_forward.1} parent=27 // pred_check
        %p345 = pneg %p94
      $region30: #{unet_upsampling_block3d_forward.1} parent=27 // pred_check_branch
        %347 = sbr.rel (%p345) target = $region32
      $region31: #{unet_upsampling_block3d_forward.1} parent=27 // pred_region
        %s348 = smul.u32 4, %s18
      $region32: #{unet_upsampling_block3d_forward.1} parent=27 // pred_fallthru
        _
    $region28: #{unet_upsampling_block3d_forward.1} parent=5 // pred_fallthru
      _
    %p349 = scmp.le.s32.totalorder 2, %s8
    // Predicated region
    $region33: #{unet_upsampling_block3d_forward.1} parent=5 // pred_check
      %p350 = pneg %p349
    $region34: #{unet_upsampling_block3d_forward.1} parent=5 // pred_check_branch
      %352 = sbr.rel (%p350) target = $region36
    $region35: #{unet_upsampling_block3d_forward.1} parent=5 // pred_region
      %s353 = ssub.s32 %s8, 2
      // Predicated region
      $region37: #{unet_upsampling_block3d_forward.1} parent=35 // pred_check
        %p354 = pneg %p100
      $region38: #{unet_upsampling_block3d_forward.1} parent=35 // pred_check_branch
        %356 = sbr.rel (%p354) target = $region40
      $region39: #{unet_upsampling_block3d_forward.1} parent=35 // pred_region
        %s357 = smul.u32 4, %s20
        %p358 = scmp.lt.s32.totalorder %s19, 1
        %s359 = scalar_select %p358, %s19, 1
        %p360 = scmp.lt.s32.totalorder %s357, 3
        %s361 = scalar_select %p360, %s357, 3
        %s362 = smul.addr %s359, 16
        %s363 = sadd.s32 %s361, %s362
        %s364 = smul.addr %s363, 8
        %s365 = scalar_lea.vmem %s2, %s364
      $region40: #{unet_upsampling_block3d_forward.1} parent=35 // pred_fallthru
        _
    $region36: #{unet_upsampling_block3d_forward.1} parent=5 // pred_fallthru
      _
  $region6: #{unet_upsampling_block3d_forward.1} parent=0 // loop_footer
    %s12 = sadd.s32 1, %s8
  $region7: #{unet_upsampling_block3d_forward.1} parent=0 // loop_footer_branch
    %7 = sbr.rel target = $region3
  $region8: #{unet_upsampling_block3d_forward.1} parent=0 // loop_exit
    _

</llo_original>
